<compile_context>
chip_gen: v7x
topology: tpu7x:2x2x1
jax: 0.10.0
libtpu: 0.0.40
codegen_flags: <defaults>
</compile_context>

<pallas_src>
import math
from functools import partial

import jax
import jax.numpy as jnp
from jax import lax
from jax.experimental import pallas as pl
from jax.experimental.pallas import tpu as pltpu

RHO = 0.04
T = 0.1
SIGMA = 0.1
EPS_NORM = 1e-12          # F.normalize eps (applied to the norm)
EPS = 1e-8
NEG_BIG = -1e30           # finite stand-in for -inf (avoids inf-inf NaNs)


def _round_up(x, m):
    return ((x + m - 1) // m) * m


def _madacos_tile_kernel(num_classes, lab_ref, embs_ref, w_ref,
                         mneg_ref, sneg_ref):
    """Grid = (B-tiles, C-tiles), C last ("arbitrary").

    Per step: normalize the [Ct, D] weight tile, MXU-matmul against the
    pre-scaled normalized embedding tile -> scale*cos tile, mask the target /
    padded columns, and online-accumulate per-row running max (mneg) and the
    max-shifted exp-sum (sneg) of the negative scaled cosines.  The [Bt, 1]
    outputs stay VMEM-resident across the C axis (accumulators).
    """
    ci = pl.program_id(1)

    @pl.when(ci == 0)
    def _init():
        mneg_ref[...] = jnp.full(mneg_ref.shape, NEG_BIG, jnp.float32)
        sneg_ref[...] = jnp.zeros(sneg_ref.shape, jnp.float32)

    w = w_ref[...]                                               # [Ct, D]
    inv_norm = lax.rsqrt(
        jnp.maximum(jnp.sum(w * w, axis=1, keepdims=True),
                    EPS_NORM * EPS_NORM))                        # == 1/max(||w||, eps)
    w_n = w * inv_norm

    # Embeddings were pre-multiplied by the adaptive scale in the wrapper, so
    # this MXU matmul directly yields scale * cos(theta).
    s_cos = lax.dot_general(embs_ref[...], w_n, (((1,), (1,)), ((), ())),
                            preferred_element_type=jnp.float32)  # [Bt, Ct]

    bt, ct = s_cos.shape
    col = lax.broadcasted_iota(jnp.int32, (bt, ct), 1) + ci * ct  # global class idx
    valid = (col != lab_ref[...]) & (col < num_classes)           # mask target + pad
    neg = jnp.where(valid, s_cos, NEG_BIG)

    m_old = mneg_ref[...]
    m_new = jnp.maximum(m_old, jnp.max(neg, axis=1, keepdims=True))
    alpha = jnp.exp(m_old - m_new)                               # rescale old sum
    p = jnp.exp(neg - m_new)                                     # masked -> 0
    sneg_ref[...] = alpha * sneg_ref[...] + jnp.sum(p, axis=1, keepdims=True)
    mneg_ref[...] = m_new


def _madacos_reduce(emb_scaled, labels2d, weight_padded, num_classes, bt, ct):
    b_pad, d = emb_scaled.shape
    c_pad = weight_padded.shape[0]
    nb, nc = b_pad // bt, c_pad // ct

    kernel = partial(_madacos_tile_kernel, num_classes)
    return pl.pallas_call(
        kernel,
        out_shape=(jax.ShapeDtypeStruct((b_pad, 1), jnp.float32),
                   jax.ShapeDtypeStruct((b_pad, 1), jnp.float32)),
        grid_spec=pltpu.PrefetchScalarGridSpec(
            num_scalar_prefetch=0,
            grid=(nb, nc),
            in_specs=[
                pl.BlockSpec((bt, 1), lambda bi, ci: (bi, 0)),   # labels (int32)
                pl.BlockSpec((bt, d), lambda bi, ci: (bi, 0)),   # scale * emb_n
                pl.BlockSpec((ct, d), lambda bi, ci: (ci, 0)),   # raw weight tile
            ],
            out_specs=(pl.BlockSpec((bt, 1), lambda bi, ci: (bi, 0)),
                       pl.BlockSpec((bt, 1), lambda bi, ci: (bi, 0))),
        ),
        compiler_params=pltpu.CompilerParams(
            dimension_semantics=("parallel", "arbitrary"),
            vmem_limit_bytes=32 * 1024 * 1024),
    )(labels2d, emb_scaled, weight_padded)


@jax.jit
def madacos_loss(embeddings, labels, weight):
    B, D = embeddings.shape
    C = weight.shape[0]

    # ---- static tile sizes (128-aligned C tile, budgeted for double-buffered
    #      f32 weight tiles; conservative enough for v5e/v6e/v7x) ----
    bt = min(128, _round_up(B, 8))
    b_pad = _round_up(B, bt)
    ct = (8 * 1024 * 1024) // max(1, 2 * D * 4)       # ~8 MiB of streamed weight
    ct = max(128, min(2048, (ct // 128) * 128))
    ct = min(ct, _round_up(C, 128))
    c_pad = _round_up(C, ct)

    emb = embeddings.astype(jnp.float32)
    w = weight.astype(jnp.float32)
    lab = labels.astype(jnp.int32)

    # ---- O(B*D) prologue in plain JAX: normalize, gather label rows of the
    #      weight for the target cosines, torch.median -> adaptive scale ----
    emb_n = emb * lax.rsqrt(
        jnp.maximum(jnp.sum(emb * emb, axis=1, keepdims=True),
                    EPS_NORM * EPS_NORM))
    w_lab = w[lab]                                               # [B, D]
    w_lab_n = w_lab * lax.rsqrt(
        jnp.maximum(jnp.sum(w_lab * w_lab, axis=1, keepdims=True),
                    EPS_NORM * EPS_NORM))
    tgt = jnp.sum(emb_n * w_lab_n, axis=1)                       # [B]

    # torch.median on an even-sized tensor returns the LOWER middle value.
    median = jnp.sort(tgt)[(B - 1) // 2]
    scale = math.log((1.0 - T) * (1.0 - RHO) / SIGMA) / (1.0 - median + EPS)

    # Pre-scale the normalized embeddings so the kernel's matmul gives
    # scale*cos directly (no scalar needs to be passed into the kernel).
    emb_s = emb_n * scale

    # ---- pad to tile multiples (padded rows/cols are masked in-kernel) ----
    emb_p = jnp.pad(emb_s, ((0, b_pad - B), (0, 0)))
    lab_p = jnp.pad(lab, (0, b_pad - B)).reshape(b_pad, 1)
    w_p = jnp.pad(w, ((0, c_pad - C), (0, 0)))

    mneg, sneg = _madacos_reduce(emb_p, lab_p, w_p, C, bt, ct)
    mneg = mneg[:B, 0]
    sneg = sneg[:B, 0]

    # ---- O(B) finalize in plain JAX ----
    # exp-sum per row over negatives; the zeroed target entry adds exp(0)=1.
    exp_neg_rows = jnp.exp(mneg) * sneg          # sum_{j != y_i} exp(s*cos_ij)
    exp_sum = jnp.mean(exp_neg_rows + 1.0)
    mean_cos = jnp.mean(tgt)
    margin = jnp.clip(
        mean_cos - 0.5 * jnp.log(RHO * exp_sum / (1.0 - RHO) + EPS), 0.0, 1.0)

    t_logit = scale * (tgt - margin)
    # Stable per-row logsumexp over {s*cos_neg} ∪ {t_logit}.
    m2 = jnp.maximum(mneg, t_logit)
    lse = m2 + jnp.log(sneg * jnp.exp(mneg - m2) + jnp.exp(t_logit - m2))
    return jnp.mean(lse - t_logit)


def madacos_loss_ref(embeddings, labels, weight):
    """Pure-JAX reference mirroring the PyTorch forward exactly."""
    emb_n = embeddings / jnp.maximum(
        jnp.linalg.norm(embeddings, axis=1, keepdims=True), EPS_NORM)
    w_n = weight / jnp.maximum(
        jnp.linalg.norm(weight, axis=1, keepdims=True), EPS_NORM)
    cos = emb_n @ w_n.T
    B, C = cos.shape
    tgt = cos[jnp.arange(B), labels]
    median = jnp.sort(tgt)[(B - 1) // 2]
    scale = math.log((1.0 - T) * (1.0 - RHO) / SIGMA) / (1.0 - median + EPS)
    mean_cos = jnp.mean(tgt)
    oh = jax.nn.one_hot(labels, C, dtype=jnp.float32)
    exp_sum = jnp.mean(jnp.sum(jnp.exp(scale * cos * (1.0 - oh)), axis=1))
    margin = mean_cos - 0.5 * jnp.log(RHO * exp_sum / (1.0 - RHO) + EPS)
    margin = jnp.clip(margin, 0.0, 1.0)
    logits = scale * cos * (1.0 - oh) + (scale * (tgt - margin))[:, None] * oh
    lse = jax.scipy.special.logsumexp(logits, axis=1)
    return jnp.mean(lse - logits[jnp.arange(B), labels])


if __name__ == "__main__":
    key = jax.random.PRNGKey(0)
    # (batch, embed_dim, num_classes): toy case, multi-C-tile case with column
    # padding, and a multi-B-tile case with row padding.
    for (B, D, C) in [(8, 32, 16), (8, 64, 2500), (200, 128, 1000)]:
        key, k1, k2, k3 = jax.random.split(key, 4)
        embeddings = jax.random.normal(k1, (B, D), dtype=jnp.float32)
        labels = jax.random.randint(k2, (B,), 0, C, dtype=jnp.int32)
        # nn.init.xavier_uniform_ on weight [num_classes, embed_dim]
        bound = math.sqrt(6.0 / (C + D))
        weight = jax.random.uniform(k3, (C, D), minval=-bound, maxval=bound,
                                    dtype=jnp.float32)

        loss = madacos_loss(embeddings, labels, weight)
        jax.block_until_ready(loss)

        ref = madacos_loss_ref(embeddings, labels, weight)
        assert jnp.allclose(loss, ref, rtol=1e-4, atol=1e-4), (
            (B, D, C), float(loss), float(ref))
    print("KERNEL_OK")
</pallas_src>

<mosaic_0001>
module attributes {stable_mosaic.version = 11 : i64} {
  func.func @_madacos_tile_kernel(%arg0: i32, %arg1: i32, %arg2: memref<8x1xi32, #tpu.memory_space<vmem>>, %arg3: memref<8x32xf32, #tpu.memory_space<vmem>>, %arg4: memref<128x32xf32, #tpu.memory_space<vmem>>, %arg5: memref<8x1xf32, #tpu.memory_space<vmem>>, %arg6: memref<8x1xf32, #tpu.memory_space<vmem>>) attributes {dimension_semantics = [#tpu.dimension_semantics<parallel>, #tpu.dimension_semantics<arbitrary>], iteration_bounds = array<i64: 1, 1>, scalar_prefetch = 0 : i64, scratch_operands = 0 : i64, tpu.core_type = #tpu.core_type<tc>, window_params = [{transform_indices = @transform_0, window_bounds = array<i64: 8, 1>}, {transform_indices = @transform_1, window_bounds = array<i64: 8, 32>}, {transform_indices = @transform_2, window_bounds = array<i64: 128, 32>}, {transform_indices = @transform_3, window_bounds = array<i64: 8, 1>}, {transform_indices = @transform_4, window_bounds = array<i64: 8, 1>}]} {
    %c0_i32 = arith.constant 0 : i32
    %0 = arith.cmpi eq, %arg1, %c0_i32 : i32
    %1 = arith.extui %0 : i1 to i32
    %c0_i32_0 = arith.constant 0 : i32
    %2 = arith.cmpi ne, %1, %c0_i32_0 : i32
    scf.if %2 {
      %cst_19 = arith.constant -1.000000e+30 : f32
      %42 = vector.broadcast %cst_19 : f32 to vector<8x1xf32>
      %c0_20 = arith.constant 0 : index
      %c0_21 = arith.constant 0 : index
      %43 = vector.load %arg5[%c0_20, %c0_21] : memref<8x1xf32, #tpu.memory_space<vmem>>, vector<8x1xf32>
      tpu.vector_store %arg5[%c0_20, %c0_21], %42 {strides = array<i32>} : memref<8x1xf32, #tpu.memory_space<vmem>>, vector<8x1xf32>,
      %cst_22 = arith.constant 0.000000e+00 : f32
      %44 = vector.broadcast %cst_22 : f32 to vector<8x1xf32>
      %c0_23 = arith.constant 0 : index
      %c0_24 = arith.constant 0 : index
      %45 = vector.load %arg6[%c0_23, %c0_24] : memref<8x1xf32, #tpu.memory_space<vmem>>, vector<8x1xf32>
      tpu.vector_store %arg6[%c0_23, %c0_24], %44 {strides = array<i32>} : memref<8x1xf32, #tpu.memory_space<vmem>>, vector<8x1xf32>,
    } else {
    }
    %c0 = arith.constant 0 : index
    %c0_1 = arith.constant 0 : index
    %3 = vector.load %arg4[%c0, %c0_1] : memref<128x32xf32, #tpu.memory_space<vmem>>, vector<128x32xf32>
    %4 = arith.mulf %3, %3 : vector<128x32xf32>
    %cst = arith.constant dense<0.000000e+00> : vector<128xf32>
    %5 = vector.multi_reduction <add>, %4, %cst [1] : vector<128x32xf32> to vector<128xf32>
    %6 = vector.shape_cast %5 : vector<128xf32> to vector<128x1xf32>
    %cst_2 = arith.constant 1.000000e-24 : f32
    %7 = vector.broadcast %cst_2 : f32 to vector<128x1xf32>
    %8 = arith.maximumf %6, %7 : vector<128x1xf32>
    %9 = math.rsqrt %8 : vector<128x1xf32>
    %10 = vector.broadcast %9 : vector<128x1xf32> to vector<128x32xf32>
    %11 = arith.mulf %3, %10 : vector<128x32xf32>
    %c0_3 = arith.constant 0 : index
    %c0_4 = arith.constant 0 : index
    %12 = vector.load %arg3[%c0_3, %c0_4] : memref<8x32xf32, #tpu.memory_space<vmem>>, vector<8x32xf32>
    %cst_5 = arith.constant dense<0.000000e+00> : vector<8x128xf32>
    %13 = tpu.matmul %12, %11, %cst_5 {dimension_numbers = #tpu.dot_dimension_numbers<[1], [1], [0], [0], [0, 0, 1, 0], [], []>} : vector<8x32xf32>, vector<128x32xf32>, vector<8x128xf32> -> vector<8x128xf32>
    %14 = tpu.iota {dimensions = array<i32: 1>} : vector<8x128xi32>
    %c128_i32 = arith.constant 128 : i32
    %15 = arith.muli %arg1, %c128_i32 : i32
    %16 = vector.broadcast %15 : i32 to vector<8x128xi32>
    %17 = arith.addi %14, %16 : vector<8x128xi32>
    %c0_6 = arith.constant 0 : index
    %c0_7 = arith.constant 0 : index
    %18 = vector.load %arg2[%c0_6, %c0_7] : memref<8x1xi32, #tpu.memory_space<vmem>>, vector<8x1xi32>
    %19 = vector.broadcast %18 : vector<8x1xi32> to vector<8x128xi32>
    %20 = arith.cmpi ne, %17, %19 : vector<8x128xi32>
    %c16_i32 = arith.constant 16 : i32
    %21 = vector.broadcast %c16_i32 : i32 to vector<8x128xi32>
    %22 = arith.cmpi slt, %17, %21 : vector<8x128xi32>
    %23 = arith.andi %20, %22 : vector<8x128xi1>
    %cst_8 = arith.constant -1.000000e+30 : f32
    %24 = vector.broadcast %cst_8 : f32 to vector<8x128xf32>
    %25 = arith.select %23, %13, %24 : vector<8x128xi1>, vector<8x128xf32>
    %c0_9 = arith.constant 0 : index
    %c0_10 = arith.constant 0 : index
    %26 = vector.load %arg5[%c0_9, %c0_10] : memref<8x1xf32, #tpu.memory_space<vmem>>, vector<8x1xf32>
    %cst_11 = arith.constant dense<0xFF800000> : vector<8xf32>
    %27 = vector.multi_reduction <maximumf>, %25, %cst_11 [1] : vector<8x128xf32> to vector<8xf32>
    %28 = vector.shape_cast %27 : vector<8xf32> to vector<8x1xf32>
    %29 = arith.maximumf %26, %28 : vector<8x1xf32>
    %30 = arith.subf %26, %29 : vector<8x1xf32>
    %31 = math.exp %30 : vector<8x1xf32>
    %32 = vector.broadcast %29 : vector<8x1xf32> to vector<8x128xf32>
    %33 = arith.subf %25, %32 : vector<8x128xf32>
    %34 = math.exp %33 : vector<8x128xf32>
    %c0_12 = arith.constant 0 : index
    %c0_13 = arith.constant 0 : index
    %35 = vector.load %arg6[%c0_12, %c0_13] : memref<8x1xf32, #tpu.memory_space<vmem>>, vector<8x1xf32>
    %36 = arith.mulf %31, %35 : vector<8x1xf32>
    %cst_14 = arith.constant dense<0.000000e+00> : vector<8xf32>
    %37 = vector.multi_reduction <add>, %34, %cst_14 [1] : vector<8x128xf32> to vector<8xf32>
    %38 = vector.shape_cast %37 : vector<8xf32> to vector<8x1xf32>
    %39 = arith.addf %36, %38 : vector<8x1xf32>
    %c0_15 = arith.constant 0 : index
    %c0_16 = arith.constant 0 : index
    %40 = vector.load %arg6[%c0_15, %c0_16] : memref<8x1xf32, #tpu.memory_space<vmem>>, vector<8x1xf32>
    tpu.vector_store %arg6[%c0_15, %c0_16], %39 {strides = array<i32>} : memref<8x1xf32, #tpu.memory_space<vmem>>, vector<8x1xf32>,
    %c0_17 = arith.constant 0 : index
    %c0_18 = arith.constant 0 : index
    %41 = vector.load %arg5[%c0_17, %c0_18] : memref<8x1xf32, #tpu.memory_space<vmem>>, vector<8x1xf32>
    tpu.vector_store %arg5[%c0_17, %c0_18], %29 {strides = array<i32>} : memref<8x1xf32, #tpu.memory_space<vmem>>, vector<8x1xf32>,
    return
  }
  func.func @transform_0(%arg0: i32, %arg1: i32) -> (i32, i32) {
    %c0_i32 = arith.constant 0 : i32
    %c0_i32_0 = arith.constant 0 : i32
    return %arg0, %c0_i32 : i32, i32
  }
  func.func @transform_1(%arg0: i32, %arg1: i32) -> (i32, i32) {
    %c0_i32 = arith.constant 0 : i32
    %c0_i32_0 = arith.constant 0 : i32
    return %arg0, %c0_i32 : i32, i32
  }
  func.func @transform_2(%arg0: i32, %arg1: i32) -> (i32, i32) {
    %c0_i32 = arith.constant 0 : i32
    %c0_i32_0 = arith.constant 0 : i32
    return %arg1, %c0_i32 : i32, i32
  }
  func.func @transform_3(%arg0: i32, %arg1: i32) -> (i32, i32) {
    %c0_i32 = arith.constant 0 : i32
    %c0_i32_0 = arith.constant 0 : i32
    return %arg0, %c0_i32 : i32, i32
  }
  func.func @transform_4(%arg0: i32, %arg1: i32) -> (i32, i32) {
    %c0_i32 = arith.constant 0 : i32
    %c0_i32_0 = arith.constant 0 : i32
    return %arg0, %c0_i32 : i32, i32
  }
}

</mosaic_0001>

<llo_original>
// kernel: madacos_loss.1
$region0: #{madacos_loss.1}
  #allocation0 [shape = 'u32[]', space=smem, size = 0x4, offset = 0x4, fixed_abs, tag = 'smem constant byte address 0x4 - core index']
  #allocation1 [shape = 'u32[144,128]{1,0:T(1,128)}', space=vmem, size = 0x12000, scoped, tag = 'internal scratch']
  %s0 = inlined_call_operand.vmem [shape: s32[8,1], index: 0, kind: input, shape index: {}]
  %s1 = inlined_call_operand.vmem [shape: f32[8,32], index: 1, kind: input, shape index: {}]
  %s2 = inlined_call_operand.vmem [shape: f32[128,32], index: 2, kind: input, shape index: {}]
  %s3 = inlined_call_operand.vmem [shape: f32[8,1], index: 3, kind: output, shape index: {0}]
  %s4 = inlined_call_operand.vmem [shape: f32[8,1], index: 4, kind: output, shape index: {1}]
  %5 = xla_tuple %s3, %s4
  %s6 = sld [smem:[#allocation0]]
  $region34: #{madacos_loss.1} parent=0
    _
  %s8 = ssub.s32 1, %s6
  %s9 = scalar_select 0, %s8, %s6
  // Predicated region
  $region2: #{madacos_loss.1} parent=0 // pred_check
    _
  $region3: #{madacos_loss.1} parent=0 // pred_check_branch
    %11 = sbr.rel (0) target = $region5
  $region4: #{madacos_loss.1} parent=0 // pred_region
    _
  $region5: #{madacos_loss.1} parent=0 // pred_fallthru
    _
  // Predicated region
  $region6: #{madacos_loss.1} parent=0 // pred_check
    _
  $region7: #{madacos_loss.1} parent=0 // pred_check_branch
    %13 = sbr.rel (0) target = $region9
  $region8: #{madacos_loss.1} parent=0 // pred_region
    _
  $region9: #{madacos_loss.1} parent=0 // pred_fallthru
    _
  // Predicated region
  $region10: #{madacos_loss.1} parent=0 // pred_check
    _
  $region11: #{madacos_loss.1} parent=0 // pred_check_branch
    %15 = sbr.rel (0) target = $region13
  $region12: #{madacos_loss.1} parent=0 // pred_region
    _
  $region13: #{madacos_loss.1} parent=0 // pred_fallthru
    _
  %p16 = scmp.eq.s32.totalorder 0, 0
  // Predicated region
  $region14: #{madacos_loss.1} parent=0 // pred_check
    %p17 = pneg %p16
  $region15: #{madacos_loss.1} parent=0 // pred_check_branch
    %19 = sbr.rel (%p17) target = $region17
  $region16: #{madacos_loss.1} parent=0 // pred_region
    %vm20 = vcmask 7168
    %21 = vst.msk [vmem:[%s3] sm:$0xff] %vm20, -1e+30
    %22 = vst.msk [vmem:[%s4] sm:$0xff] %vm20, 0.0
  $region17: #{madacos_loss.1} parent=0 // pred_fallthru
    _
  %v23 = vld [vmem:[%s2] sm:$0xff]
  %v24 = vld [vmem:[%s2 + $0x8] sm:$0xff]
  %v25 = vld [vmem:[%s2 + $0x10] sm:$0xff]
  %v26 = vld [vmem:[%s2 + $0x18] sm:$0xff]
  %v27 = vld [vmem:[%s2 + $0x20] sm:$0xff]
  %v28 = vld [vmem:[%s2 + $0x28] sm:$0xff]
  %v29 = vld [vmem:[%s2 + $0x30] sm:$0xff]
  %v30 = vld [vmem:[%s2 + $0x38] sm:$0xff]
  %v31 = vld [vmem:[%s2 + $0x40] sm:$0xff]
  %v32 = vld [vmem:[%s2 + $0x48] sm:$0xff]
  %v33 = vld [vmem:[%s2 + $0x50] sm:$0xff]
  %v34 = vld [vmem:[%s2 + $0x58] sm:$0xff]
  %v35 = vld [vmem:[%s2 + $0x60] sm:$0xff]
  %v36 = vld [vmem:[%s2 + $0x68] sm:$0xff]
  %v37 = vld [vmem:[%s2 + $0x70] sm:$0xff]
  %v38 = vld [vmem:[%s2 + $0x78] sm:$0xff]
  %v39 = vmul.f32 %v23, %v23
  %v40 = vmul.f32 %v24, %v24
  %v41 = vmul.f32 %v25, %v25
  %v42 = vmul.f32 %v26, %v26
  %v43 = vmul.f32 %v27, %v27
  %v44 = vmul.f32 %v28, %v28
  %v45 = vmul.f32 %v29, %v29
  %v46 = vmul.f32 %v30, %v30
  %v47 = vmul.f32 %v31, %v31
  %v48 = vmul.f32 %v32, %v32
  %v49 = vmul.f32 %v33, %v33
  %v50 = vmul.f32 %v34, %v34
  %v51 = vmul.f32 %v35, %v35
  %v52 = vmul.f32 %v36, %v36
  %v53 = vmul.f32 %v37, %v37
  %v54 = vmul.f32 %v38, %v38
  %vm55 = vcmask 261120
  %v56 = vsel %vm55, %v39, 0.0
  %57 = vadd.xlane.f32.xlu0 %v56
  %v58 = vpop.xlane.xlu0 %57
  %v59 = vsel %vm55, %v40, 0.0
  %60 = vadd.xlane.f32.xlu0 %v59
  %v61 = vpop.xlane.xlu0 %60
  %v62 = vsel %vm55, %v41, 0.0
  %63 = vadd.xlane.f32.xlu0 %v62
  %v64 = vpop.xlane.xlu0 %63
  %v65 = vsel %vm55, %v42, 0.0
  %66 = vadd.xlane.f32.xlu0 %v65
  %v67 = vpop.xlane.xlu0 %66
  %v68 = vsel %vm55, %v43, 0.0
  %69 = vadd.xlane.f32.xlu0 %v68
  %v70 = vpop.xlane.xlu0 %69
  %v71 = vsel %vm55, %v44, 0.0
  %72 = vadd.xlane.f32.xlu0 %v71
  %v73 = vpop.xlane.xlu0 %72
  %v74 = vsel %vm55, %v45, 0.0
  %75 = vadd.xlane.f32.xlu0 %v74
  %v76 = vpop.xlane.xlu0 %75
  %v77 = vsel %vm55, %v46, 0.0
  %78 = vadd.xlane.f32.xlu0 %v77
  %v79 = vpop.xlane.xlu0 %78
  %v80 = vsel %vm55, %v47, 0.0
  %81 = vadd.xlane.f32.xlu0 %v80
  %v82 = vpop.xlane.xlu0 %81
  %v83 = vsel %vm55, %v48, 0.0
  %84 = vadd.xlane.f32.xlu0 %v83
  %v85 = vpop.xlane.xlu0 %84
  %v86 = vsel %vm55, %v49, 0.0
  %87 = vadd.xlane.f32.xlu0 %v86
  %v88 = vpop.xlane.xlu0 %87
  %v89 = vsel %vm55, %v50, 0.0
  %90 = vadd.xlane.f32.xlu0 %v89
  %v91 = vpop.xlane.xlu0 %90
  %v92 = vsel %vm55, %v51, 0.0
  %93 = vadd.xlane.f32.xlu0 %v92
  %v94 = vpop.xlane.xlu0 %93
  %v95 = vsel %vm55, %v52, 0.0
  %96 = vadd.xlane.f32.xlu0 %v95
  %v97 = vpop.xlane.xlu0 %96
  %v98 = vsel %vm55, %v53, 0.0
  %99 = vadd.xlane.f32.xlu0 %v98
  %v100 = vpop.xlane.xlu0 %99
  %v101 = vsel %vm55, %v54, 0.0
  %102 = vadd.xlane.f32.xlu0 %v101
  %v103 = vpop.xlane.xlu0 %102
  %v104 = vmax.f32 %v58, 1e-24
  %v105 = vmax.f32 %v61, 1e-24
  %v106 = vmax.f32 %v64, 1e-24
  %v107 = vmax.f32 %v67, 1e-24
  %v108 = vmax.f32 %v70, 1e-24
  %v109 = vmax.f32 %v73, 1e-24
  %v110 = vmax.f32 %v76, 1e-24
  %v111 = vmax.f32 %v79, 1e-24
  %v112 = vmax.f32 %v82, 1e-24
  %v113 = vmax.f32 %v85, 1e-24
  %v114 = vmax.f32 %v88, 1e-24
  %v115 = vmax.f32 %v91, 1e-24
  %v116 = vmax.f32 %v94, 1e-24
  %v117 = vmax.f32 %v97, 1e-24
  %v118 = vmax.f32 %v100, 1e-24
  %v119 = vmax.f32 %v103, 1e-24
  %v120 = vrsqrt.pop %v104
  %v121 = vrsqrt.pop %v105
  %v122 = vrsqrt.pop %v106
  %v123 = vrsqrt.pop %v107
  %v124 = vrsqrt.pop %v108
  %v125 = vrsqrt.pop %v109
  %v126 = vrsqrt.pop %v110
  %v127 = vrsqrt.pop %v111
  %v128 = vrsqrt.pop %v112
  %v129 = vrsqrt.pop %v113
  %v130 = vrsqrt.pop %v114
  %v131 = vrsqrt.pop %v115
  %v132 = vrsqrt.pop %v116
  %v133 = vrsqrt.pop %v117
  %v134 = vrsqrt.pop %v118
  %v135 = vrsqrt.pop %v119
  %v136 = vmul.f32 %v23, %v120
  %v137 = vmul.f32 %v24, %v121
  %v138 = vmul.f32 %v25, %v122
  %v139 = vmul.f32 %v26, %v123
  %v140 = vmul.f32 %v27, %v124
  %v141 = vmul.f32 %v28, %v125
  %v142 = vmul.f32 %v29, %v126
  %v143 = vmul.f32 %v30, %v127
  %v144 = vmul.f32 %v31, %v128
  %v145 = vmul.f32 %v32, %v129
  %v146 = vmul.f32 %v33, %v130
  %v147 = vmul.f32 %v34, %v131
  %v148 = vmul.f32 %v35, %v132
  %v149 = vmul.f32 %v36, %v133
  %v150 = vmul.f32 %v37, %v134
  %v151 = vmul.f32 %v38, %v135
  %v152 = vld [vmem:[%s1] sm:$0xff]
  %v154 = vsel %vm55, %v152, 0
  %v157 = vsel %vm55, %v136, 0
  %v160 = vsel %vm55, %v137, 0
  %v163 = vsel %vm55, %v138, 0
  %v166 = vsel %vm55, %v139, 0
  %v169 = vsel %vm55, %v140, 0
  %v172 = vsel %vm55, %v141, 0
  %v175 = vsel %vm55, %v142, 0
  %v178 = vsel %vm55, %v143, 0
  %v181 = vsel %vm55, %v144, 0
  %v184 = vsel %vm55, %v145, 0
  %v187 = vsel %vm55, %v146, 0
  %v190 = vsel %vm55, %v147, 0
  %v193 = vsel %vm55, %v148, 0
  %v196 = vsel %vm55, %v149, 0
  %v199 = vsel %vm55, %v150, 0
  %v202 = vsel %vm55, %v151, 0
  %204 = vmatprep.subr.mxu0 0.0
  %205 = vmatpush1.xpose.msra.mxu0 %v157
  %206 = vmatprep.subr.mxu0 0.0
  %207 = vmatpush1.xpose.msra.mxu0 %v160
  %208 = vmatprep.subr.mxu0 0.0
  %209 = vmatpush1.xpose.msra.mxu0 %v163
  %210 = vmatprep.subr.mxu0 0.0
  %211 = vmatpush1.xpose.msra.mxu0 %v166
  %212 = vmatprep.subr.mxu0 0.0
  %213 = vmatpush1.xpose.msra.mxu0 %v169
  %214 = vmatprep.subr.mxu0 0.0
  %215 = vmatpush1.xpose.msra.mxu0 %v172
  %216 = vmatprep.subr.mxu0 0.0
  %217 = vmatpush1.xpose.msra.mxu0 %v175
  %218 = vmatprep.subr.mxu0 0.0
  %219 = vmatpush1.xpose.msra.mxu0 %v178
  %220 = vmatprep.subr.mxu0 0.0
  %221 = vmatpush1.xpose.msra.mxu0 %v181
  %222 = vmatprep.subr.mxu0 0.0
  %223 = vmatpush1.xpose.msra.mxu0 %v184
  %224 = vmatprep.subr.mxu0 0.0
  %225 = vmatpush1.xpose.msra.mxu0 %v187
  %226 = vmatprep.subr.mxu0 0.0
  %227 = vmatpush1.xpose.msra.mxu0 %v190
  %228 = vmatprep.subr.mxu0 0.0
  %229 = vmatpush1.xpose.msra.mxu0 %v193
  %230 = vmatprep.subr.mxu0 0.0
  %231 = vmatpush1.xpose.msra.mxu0 %v196
  %232 = vmatprep.subr.mxu0 0.0
  %233 = vmatpush1.xpose.msra.mxu0 %v199
  %234 = vmatprep.subr.mxu0 0.0
  %235 = vmatpush1.xpose.msra.mxu0 %v202
  %236 = vmatprep.subr.mxu0 0.0
  %237 = vmatpush1.xpose.msra.mxu0 0.0
  %238 = vmatprep.subr.mxu0 0.0
  %239 = vmatpush1.xpose.msra.mxu0 0.0
  %240 = vmatprep.subr.mxu0 0.0
  %241 = vmatpush1.xpose.msra.mxu0 0.0
  %242 = vmatprep.subr.mxu0 0.0
  %243 = vmatpush1.xpose.msra.mxu0 0.0
  %244 = vmatprep.subr.mxu0 0.0
  %245 = vmatpush1.xpose.msra.mxu0 0.0
  %246 = vmatprep.subr.mxu0 0.0
  %247 = vmatpush1.xpose.msra.mxu0 0.0
  %248 = vmatprep.subr.mxu0 0.0
  %249 = vmatpush1.xpose.msra.mxu0 0.0
  %250 = vmatprep.subr.mxu0 0.0
  %251 = vmatpush1.xpose.msra.mxu0 0.0
  %252 = vmatprep.subr.mxu0 0.0
  %253 = vmatpush1.xpose.msra.mxu0 0.0
  %254 = vmatprep.subr.mxu0 0.0
  %255 = vmatpush1.xpose.msra.mxu0 0.0
  %256 = vmatprep.subr.mxu0 0.0
  %257 = vmatpush1.xpose.msra.mxu0 0.0
  %258 = vmatprep.subr.mxu0 0.0
  %259 = vmatpush1.xpose.msra.mxu0 0.0
  %260 = vmatprep.subr.mxu0 0.0
  %261 = vmatpush1.xpose.msra.mxu0 0.0
  %262 = vmatprep.subr.mxu0 0.0
  %263 = vmatpush1.xpose.msra.mxu0 0.0
  %264 = vmatprep.subr.mxu0 0.0
  %265 = vmatpush1.xpose.msra.mxu0 0.0
  %266 = vmatprep.subr.mxu0 0.0
  %267 = vmatpush1.xpose.msra.mxu0 0.0
  %268 = vmatprep.mubr.f32.mxu0 0.0
  %269 = vmatmul.mubr.f32.gmra.mrb[0].mxu0 %v154
  %v270 = vpop.f32.mrb[0].mxu0
  %v271 = vadd.f32 0.0, %v270
  %v272 = vpop.f32.mrb[0].mxu0
  %273 = vdwg.mxu0
  %v274 = vlaneseq
  %v275 = vand.u32 %v274, 127
  %s276 = smul.u32 0, 128
  %v277 = vstv %s276
  %v278 = vadd.s32 %v275, %v277
  %v279 = vld [vmem:[%s0] sm:$0xff]
  %280 = vset.pattern.permute.xlu0 0
  %281 = vperm.xlu0 %280, %v279
  %v282 = vpop.permute.xlu0 %281
  %vm283 = vcmp.ne.s32.totalorder %v278, %v282
  %vm284 = vcmp.lt.s32.totalorder %v278, 16
  %vm285 = vmand %vm283, %vm284
  %v286 = vsel %vm285, %v271, -1e+30
  %v287 = vld [vmem:[%s3] sm:$0xff]
  %288 = vmax.xlane.f32.xlu0 %v286
  %v289 = vpop.xlane.xlu0 %288
  %v290 = vmax.f32 %v287, %v289
  %v291 = vsub.f32 %v287, %v290
  %v292 = vmul.f32 %v291, 1.442695
  %v293 = vpow.pop %v292
  %295 = vset.pattern.permute.xlu0 0
  %296 = vperm.xlu0 %295, %v290
  %v297 = vpop.permute.xlu0 %296
  %v299 = vsub.f32 %v286, %v297
  %v300 = vmul.f32 %v299, 1.442695
  %v301 = vpow.pop %v300
  %v302 = vld [vmem:[%s4] sm:$0xff]
  %v303 = vmul.f32 %v293, %v302
  %304 = vadd.xlane.f32.xlu0 %v301
  %v305 = vpop.xlane.xlu0 %304
  %v306 = vadd.f32 %v303, %v305
  %vm307 = vcmask 7168
  %308 = vst.msk [vmem:[%s4] sm:$0xff] %vm307, %v306
  %309 = vst.msk [vmem:[%s3] sm:$0xff] %vm307, %v290
  // Predicated region
  $region18: #{madacos_loss.1} parent=0 // pred_check
    _
  $region19: #{madacos_loss.1} parent=0 // pred_check_branch
    %311 = sbr.rel (0) target = $region21
  $region20: #{madacos_loss.1} parent=0 // pred_region
    _
  $region21: #{madacos_loss.1} parent=0 // pred_fallthru
    _
  // Predicated region
  $region22: #{madacos_loss.1} parent=0 // pred_check
    _
  $region23: #{madacos_loss.1} parent=0 // pred_check_branch
    %313 = sbr.rel (0) target = $region25
  $region24: #{madacos_loss.1} parent=0 // pred_region
    _
  $region25: #{madacos_loss.1} parent=0 // pred_fallthru
    _
  // Predicated region
  $region26: #{madacos_loss.1} parent=0 // pred_check
    _
  $region27: #{madacos_loss.1} parent=0 // pred_check_branch
    %315 = sbr.rel (0) target = $region29
  $region28: #{madacos_loss.1} parent=0 // pred_region
    _
  $region29: #{madacos_loss.1} parent=0 // pred_fallthru
    _
  // Predicated region
  $region30: #{madacos_loss.1} parent=0 // pred_check
    _
  $region31: #{madacos_loss.1} parent=0 // pred_check_branch
    %317 = sbr.rel (0) target = $region33
  $region32: #{madacos_loss.1} parent=0 // pred_region
    _
  $region33: #{madacos_loss.1} parent=0 // pred_fallthru
    _

</llo_original>
